<compile_context>
chip_gen: v7x
topology: tpu7x:2x2x1
jax: 0.10.0
libtpu: 0.0.40
codegen_flags: <defaults>
</compile_context>

<pallas_src>
import jax
import jax.numpy as jnp
from jax.experimental import pallas as pl
from jax.experimental.pallas import tpu as pltpu


def _round_up(x, m):
    return ((x + m - 1) // m) * m


def _mlp_kernel(x_ref,
                w1, w2, w3, w4, w5, w6, w7,
                b1, b2, b3, b4, b5, b6, b7,
                o_ref):
    # x_ref: (TB, D0p) bf16 batch tile.
    # w*:    (in_p, out_p) bf16, resident across all grid steps.
    # b*:    (1, out_p) f32.
    def layer(h, w, b):
        acc = jnp.dot(h, w[...], preferred_element_type=jnp.float32) + b[...]
        return jnp.maximum(acc, 0.0).astype(jnp.bfloat16)

    h = x_ref[...]
    h = layer(h, w1, b1)
    h = layer(h, w2, b2)
    h = layer(h, w3, b3)
    h = layer(h, w4, b4)
    h = layer(h, w5, b5)
    h = layer(h, w6, b6)
    # Final Linear(d, 1): out-dim zero-padded to 128 so the store is a lane-dense
    # unmasked vst; the wrapper slices column 0.
    o_ref[...] = (jnp.dot(h, w7[...], preferred_element_type=jnp.float32)
                  + b7[...]).astype(o_ref.dtype)


def nn_batchnorm_forward(x, weights, biases, *, batch_tile=256):
    """x: (B, ...) float; weights[i]: (in_i, out_i) f32 (== PyTorch W.T); biases[i]: (out_i,) or (1, out_i)."""
    B = x.shape[0]
    x2d = x.reshape(B, -1).astype(jnp.float32)          # nn.Flatten()
    d_in = x2d.shape[1]
    if d_in != weights[0].shape[0]:
        raise ValueError(
            f"flattened input has {d_in} features, expected {weights[0].shape[0]}")

    # ---- zero-pad all feature dims to multiples of 128 (lane-dense; pads are zero
    #      in both weights and biases so every padded activation column is exactly 0).
    in_pads = [_round_up(w.shape[0], 128) for w in weights]
    out_pads = [_round_up(w.shape[1], 128) for w in weights]
    w_p, b_p = [], []
    for w, b, ip, op in zip(weights, biases, in_pads, out_pads):
        b = jnp.asarray(b, jnp.float32).reshape(1, -1)
        wp = jnp.zeros((ip, op), jnp.float32).at[:w.shape[0], :w.shape[1]].set(w)
        bp = jnp.zeros((1, op), jnp.float32).at[:, :b.shape[1]].set(b)
        w_p.append(wp.astype(jnp.bfloat16))   # bf16 MXU operands
        b_p.append(bp)                        # f32 bias (VPU math stays f32)
    d0, d_out = in_pads[0], out_pads[-1]

    # ---- batch tiling: >=256 rows per tile feeds the 256-wide MXU on v6e/v7x;
    #      tiny B degenerates to a single sublane-aligned tile (latency-bound anyway).
    if B >= batch_tile:
        tb = batch_tile
        b_pad = _round_up(B, tb)
    else:
        tb = max(8, _round_up(B, 8))
        b_pad = tb
    x_p = jnp.zeros((b_pad, d0), jnp.bfloat16).at[:B, :d_in].set(
        x2d.astype(jnp.bfloat16))

    grid = (b_pad // tb,)
    x_spec = pl.BlockSpec((tb, d0), lambda i: (i, 0))
    out_spec = pl.BlockSpec((tb, d_out), lambda i: (i, 0))
    w_specs = [pl.BlockSpec(w.shape, lambda i: (0, 0)) for w in w_p]   # VMEM-resident
    b_specs = [pl.BlockSpec(b.shape, lambda i: (0, 0)) for b in b_p]

    # ---- VMEM budget (double-buffered worst case) + headroom, capped for v7x (64 MiB)
    bytes_w = sum(int(w.size) * 2 for w in w_p)
    bytes_b = sum(int(b.size) * 4 for b in b_p)
    vmem_budget = (2 * (bytes_w + bytes_b)
                   + 2 * tb * d0 * 2            # double-buffered bf16 x tile
                   + 2 * tb * d_out * 4         # double-buffered f32 out tile
                   + 8 * tb * max(out_pads) * 4 # intermediate activation headroom
                   + (4 << 20))
    vmem_limit = int(min(max(vmem_budget, 16 << 20), 64 << 20))

    flops = 2 * b_pad * sum(ip * op for ip, op in zip(in_pads, out_pads))
    bytes_accessed = bytes_w + bytes_b + b_pad * d0 * 2 + b_pad * d_out * 4

    out = pl.pallas_call(
        _mlp_kernel,
        out_shape=jax.ShapeDtypeStruct((b_pad, d_out), jnp.float32),
        grid=grid,
        in_specs=[x_spec] + w_specs + b_specs,
        out_specs=out_spec,
        compiler_params=pltpu.CompilerParams(
            dimension_semantics=("parallel",),      # shards batch tiles across v7x's 2 TCs
            vmem_limit_bytes=vmem_limit),
        cost_estimate=pl.CostEstimate(
            flops=flops, transcendentals=0, bytes_accessed=bytes_accessed),
    )(x_p, *w_p, *b_p)

    return out[:B, :1]


def init_params(input_d, ratio, key):
    """Deterministic init matching the layer shapes of the PyTorch module."""
    dims = [
        (input_d, input_d * ratio),
        (input_d * ratio, input_d * ratio),
        (input_d * ratio, input_d * ratio * ratio),
        (input_d * ratio ** 2, input_d * ratio),
        (input_d * ratio, input_d * ratio),
        (input_d * ratio, input_d),
        (input_d, 1),
    ]
    weights, biases = [], []
    for (fan_in, fan_out) in dims:
        key, kw, kb = jax.random.split(key, 3)
        bound = 1.0 / jnp.sqrt(fan_in)
        # stored as (in, out) == W.T of PyTorch's (out, in)
        w = jax.random.uniform(kw, (fan_in, fan_out), jnp.float32, -bound, bound)
        b = jax.random.uniform(kb, (1, fan_out), jnp.float32, -bound, bound)
        weights.append(w)
        biases.append(b)
    return weights, biases


def reference_forward(x, weights, biases):
    """Pure-JAX reference replicating the kernel numerics (bf16 MXU inputs, f32 accumulate)."""
    h = x.reshape(x.shape[0], -1).astype(jnp.bfloat16)
    for i in range(6):
        acc = jnp.dot(h, weights[i].astype(jnp.bfloat16),
                      preferred_element_type=jnp.float32) + biases[i].reshape(1, -1)
        h = jnp.maximum(acc, 0.0).astype(jnp.bfloat16)
    return jnp.dot(h, weights[6].astype(jnp.bfloat16),
                   preferred_element_type=jnp.float32) + biases[6].reshape(1, -1)


if __name__ == "__main__":
    input_d = 32
    ratio = 2
    batch = 8

    key = jax.random.PRNGKey(0)
    key, kx = jax.random.split(key)
    # input (B, 4, 8) -> flatten to (B, 32) = input_d
    x = jax.random.normal(kx, (batch, 4, 8), jnp.float32)

    weights, biases = init_params(input_d, ratio, key)

    out = nn_batchnorm_forward(x, weights, biases)
    out = jax.block_until_ready(out)

    ref = reference_forward(x, weights, biases)
    assert out.shape == (batch, 1)
    assert jnp.allclose(out, ref, atol=2e-3, rtol=2e-3), \
        float(jnp.max(jnp.abs(out - ref)))

    print("KERNEL_OK")
</pallas_src>

<mosaic_0001>
module attributes {stable_mosaic.version = 11 : i64} {
  func.func @_mlp_kernel(%arg0: i32, %arg1: memref<8x128xbf16, #tpu.memory_space<vmem>>, %arg2: memref<128x128xbf16, #tpu.memory_space<vmem>>, %arg3: memref<128x128xbf16, #tpu.memory_space<vmem>>, %arg4: memref<128x128xbf16, #tpu.memory_space<vmem>>, %arg5: memref<128x128xbf16, #tpu.memory_space<vmem>>, %arg6: memref<128x128xbf16, #tpu.memory_space<vmem>>, %arg7: memref<128x128xbf16, #tpu.memory_space<vmem>>, %arg8: memref<128x128xbf16, #tpu.memory_space<vmem>>, %arg9: memref<1x128xf32, #tpu.memory_space<vmem>>, %arg10: memref<1x128xf32, #tpu.memory_space<vmem>>, %arg11: memref<1x128xf32, #tpu.memory_space<vmem>>, %arg12: memref<1x128xf32, #tpu.memory_space<vmem>>, %arg13: memref<1x128xf32, #tpu.memory_space<vmem>>, %arg14: memref<1x128xf32, #tpu.memory_space<vmem>>, %arg15: memref<1x128xf32, #tpu.memory_space<vmem>>, %arg16: memref<8x128xf32, #tpu.memory_space<vmem>>) attributes {dimension_semantics = [#tpu.dimension_semantics<parallel>], iteration_bounds = array<i64: 1>, scalar_prefetch = 0 : i64, scratch_operands = 0 : i64, tpu.core_type = #tpu.core_type<tc>, window_params = [{transform_indices = @transform_0, window_bounds = array<i64: 8, 128>}, {pipeline_mode = #tpu.pipeline_mode<synchronous>, transform_indices = @transform_1, window_bounds = array<i64: 128, 128>}, {pipeline_mode = #tpu.pipeline_mode<synchronous>, transform_indices = @transform_2, window_bounds = array<i64: 128, 128>}, {pipeline_mode = #tpu.pipeline_mode<synchronous>, transform_indices = @transform_3, window_bounds = array<i64: 128, 128>}, {pipeline_mode = #tpu.pipeline_mode<synchronous>, transform_indices = @transform_4, window_bounds = array<i64: 128, 128>}, {pipeline_mode = #tpu.pipeline_mode<synchronous>, transform_indices = @transform_5, window_bounds = array<i64: 128, 128>}, {pipeline_mode = #tpu.pipeline_mode<synchronous>, transform_indices = @transform_6, window_bounds = array<i64: 128, 128>}, {pipeline_mode = #tpu.pipeline_mode<synchronous>, transform_indices = @transform_7, window_bounds = array<i64: 128, 128>}, {pipeline_mode = #tpu.pipeline_mode<synchronous>, transform_indices = @transform_8, window_bounds = array<i64: 1, 128>}, {pipeline_mode = #tpu.pipeline_mode<synchronous>, transform_indices = @transform_9, window_bounds = array<i64: 1, 128>}, {pipeline_mode = #tpu.pipeline_mode<synchronous>, transform_indices = @transform_10, window_bounds = array<i64: 1, 128>}, {pipeline_mode = #tpu.pipeline_mode<synchronous>, transform_indices = @transform_11, window_bounds = array<i64: 1, 128>}, {pipeline_mode = #tpu.pipeline_mode<synchronous>, transform_indices = @transform_12, window_bounds = array<i64: 1, 128>}, {pipeline_mode = #tpu.pipeline_mode<synchronous>, transform_indices = @transform_13, window_bounds = array<i64: 1, 128>}, {pipeline_mode = #tpu.pipeline_mode<synchronous>, transform_indices = @transform_14, window_bounds = array<i64: 1, 128>}, {transform_indices = @transform_15, window_bounds = array<i64: 8, 128>}]} {
    %c0 = arith.constant 0 : index
    %c0_0 = arith.constant 0 : index
    %0 = vector.load %arg1[%c0, %c0_0] : memref<8x128xbf16, #tpu.memory_space<vmem>>, vector<8x128xbf16>
    %c0_1 = arith.constant 0 : index
    %c0_2 = arith.constant 0 : index
    %1 = vector.load %arg2[%c0_1, %c0_2] : memref<128x128xbf16, #tpu.memory_space<vmem>>, vector<128x128xbf16>
    %cst = arith.constant dense<0.000000e+00> : vector<8x128xf32>
    %2 = tpu.matmul %0, %1, %cst {dimension_numbers = #tpu.dot_dimension_numbers<[1], [0], [0], [1], [0, 0, 1, 1], [], []>} : vector<8x128xbf16>, vector<128x128xbf16>, vector<8x128xf32> -> vector<8x128xf32>
    %c0_3 = arith.constant 0 : index
    %c0_4 = arith.constant 0 : index
    %3 = vector.load %arg9[%c0_3, %c0_4] : memref<1x128xf32, #tpu.memory_space<vmem>>, vector<1x128xf32>
    %4 = vector.broadcast %3 : vector<1x128xf32> to vector<8x128xf32>
    %5 = arith.addf %2, %4 : vector<8x128xf32>
    %cst_5 = arith.constant 0.000000e+00 : f32
    %6 = vector.broadcast %cst_5 : f32 to vector<8x128xf32>
    %7 = arith.maximumf %5, %6 : vector<8x128xf32>
    %8 = arith.truncf %7 : vector<8x128xf32> to vector<8x128xbf16>
    %c0_6 = arith.constant 0 : index
    %c0_7 = arith.constant 0 : index
    %9 = vector.load %arg3[%c0_6, %c0_7] : memref<128x128xbf16, #tpu.memory_space<vmem>>, vector<128x128xbf16>
    %cst_8 = arith.constant dense<0.000000e+00> : vector<8x128xf32>
    %10 = tpu.matmul %8, %9, %cst_8 {dimension_numbers = #tpu.dot_dimension_numbers<[1], [0], [0], [1], [0, 0, 1, 1], [], []>} : vector<8x128xbf16>, vector<128x128xbf16>, vector<8x128xf32> -> vector<8x128xf32>
    %c0_9 = arith.constant 0 : index
    %c0_10 = arith.constant 0 : index
    %11 = vector.load %arg10[%c0_9, %c0_10] : memref<1x128xf32, #tpu.memory_space<vmem>>, vector<1x128xf32>
    %12 = vector.broadcast %11 : vector<1x128xf32> to vector<8x128xf32>
    %13 = arith.addf %10, %12 : vector<8x128xf32>
    %cst_11 = arith.constant 0.000000e+00 : f32
    %14 = vector.broadcast %cst_11 : f32 to vector<8x128xf32>
    %15 = arith.maximumf %13, %14 : vector<8x128xf32>
    %16 = arith.truncf %15 : vector<8x128xf32> to vector<8x128xbf16>
    %c0_12 = arith.constant 0 : index
    %c0_13 = arith.constant 0 : index
    %17 = vector.load %arg4[%c0_12, %c0_13] : memref<128x128xbf16, #tpu.memory_space<vmem>>, vector<128x128xbf16>
    %cst_14 = arith.constant dense<0.000000e+00> : vector<8x128xf32>
    %18 = tpu.matmul %16, %17, %cst_14 {dimension_numbers = #tpu.dot_dimension_numbers<[1], [0], [0], [1], [0, 0, 1, 1], [], []>} : vector<8x128xbf16>, vector<128x128xbf16>, vector<8x128xf32> -> vector<8x128xf32>
    %c0_15 = arith.constant 0 : index
    %c0_16 = arith.constant 0 : index
    %19 = vector.load %arg11[%c0_15, %c0_16] : memref<1x128xf32, #tpu.memory_space<vmem>>, vector<1x128xf32>
    %20 = vector.broadcast %19 : vector<1x128xf32> to vector<8x128xf32>
    %21 = arith.addf %18, %20 : vector<8x128xf32>
    %cst_17 = arith.constant 0.000000e+00 : f32
    %22 = vector.broadcast %cst_17 : f32 to vector<8x128xf32>
    %23 = arith.maximumf %21, %22 : vector<8x128xf32>
    %24 = arith.truncf %23 : vector<8x128xf32> to vector<8x128xbf16>
    %c0_18 = arith.constant 0 : index
    %c0_19 = arith.constant 0 : index
    %25 = vector.load %arg5[%c0_18, %c0_19] : memref<128x128xbf16, #tpu.memory_space<vmem>>, vector<128x128xbf16>
    %cst_20 = arith.constant dense<0.000000e+00> : vector<8x128xf32>
    %26 = tpu.matmul %24, %25, %cst_20 {dimension_numbers = #tpu.dot_dimension_numbers<[1], [0], [0], [1], [0, 0, 1, 1], [], []>} : vector<8x128xbf16>, vector<128x128xbf16>, vector<8x128xf32> -> vector<8x128xf32>
    %c0_21 = arith.constant 0 : index
    %c0_22 = arith.constant 0 : index
    %27 = vector.load %arg12[%c0_21, %c0_22] : memref<1x128xf32, #tpu.memory_space<vmem>>, vector<1x128xf32>
    %28 = vector.broadcast %27 : vector<1x128xf32> to vector<8x128xf32>
    %29 = arith.addf %26, %28 : vector<8x128xf32>
    %cst_23 = arith.constant 0.000000e+00 : f32
    %30 = vector.broadcast %cst_23 : f32 to vector<8x128xf32>
    %31 = arith.maximumf %29, %30 : vector<8x128xf32>
    %32 = arith.truncf %31 : vector<8x128xf32> to vector<8x128xbf16>
    %c0_24 = arith.constant 0 : index
    %c0_25 = arith.constant 0 : index
    %33 = vector.load %arg6[%c0_24, %c0_25] : memref<128x128xbf16, #tpu.memory_space<vmem>>, vector<128x128xbf16>
    %cst_26 = arith.constant dense<0.000000e+00> : vector<8x128xf32>
    %34 = tpu.matmul %32, %33, %cst_26 {dimension_numbers = #tpu.dot_dimension_numbers<[1], [0], [0], [1], [0, 0, 1, 1], [], []>} : vector<8x128xbf16>, vector<128x128xbf16>, vector<8x128xf32> -> vector<8x128xf32>
    %c0_27 = arith.constant 0 : index
    %c0_28 = arith.constant 0 : index
    %35 = vector.load %arg13[%c0_27, %c0_28] : memref<1x128xf32, #tpu.memory_space<vmem>>, vector<1x128xf32>
    %36 = vector.broadcast %35 : vector<1x128xf32> to vector<8x128xf32>
    %37 = arith.addf %34, %36 : vector<8x128xf32>
    %cst_29 = arith.constant 0.000000e+00 : f32
    %38 = vector.broadcast %cst_29 : f32 to vector<8x128xf32>
    %39 = arith.maximumf %37, %38 : vector<8x128xf32>
    %40 = arith.truncf %39 : vector<8x128xf32> to vector<8x128xbf16>
    %c0_30 = arith.constant 0 : index
    %c0_31 = arith.constant 0 : index
    %41 = vector.load %arg7[%c0_30, %c0_31] : memref<128x128xbf16, #tpu.memory_space<vmem>>, vector<128x128xbf16>
    %cst_32 = arith.constant dense<0.000000e+00> : vector<8x128xf32>
    %42 = tpu.matmul %40, %41, %cst_32 {dimension_numbers = #tpu.dot_dimension_numbers<[1], [0], [0], [1], [0, 0, 1, 1], [], []>} : vector<8x128xbf16>, vector<128x128xbf16>, vector<8x128xf32> -> vector<8x128xf32>
    %c0_33 = arith.constant 0 : index
    %c0_34 = arith.constant 0 : index
    %43 = vector.load %arg14[%c0_33, %c0_34] : memref<1x128xf32, #tpu.memory_space<vmem>>, vector<1x128xf32>
    %44 = vector.broadcast %43 : vector<1x128xf32> to vector<8x128xf32>
    %45 = arith.addf %42, %44 : vector<8x128xf32>
    %cst_35 = arith.constant 0.000000e+00 : f32
    %46 = vector.broadcast %cst_35 : f32 to vector<8x128xf32>
    %47 = arith.maximumf %45, %46 : vector<8x128xf32>
    %48 = arith.truncf %47 : vector<8x128xf32> to vector<8x128xbf16>
    %c0_36 = arith.constant 0 : index
    %c0_37 = arith.constant 0 : index
    %49 = vector.load %arg8[%c0_36, %c0_37] : memref<128x128xbf16, #tpu.memory_space<vmem>>, vector<128x128xbf16>
    %cst_38 = arith.constant dense<0.000000e+00> : vector<8x128xf32>
    %50 = tpu.matmul %48, %49, %cst_38 {dimension_numbers = #tpu.dot_dimension_numbers<[1], [0], [0], [1], [0, 0, 1, 1], [], []>} : vector<8x128xbf16>, vector<128x128xbf16>, vector<8x128xf32> -> vector<8x128xf32>
    %c0_39 = arith.constant 0 : index
    %c0_40 = arith.constant 0 : index
    %51 = vector.load %arg15[%c0_39, %c0_40] : memref<1x128xf32, #tpu.memory_space<vmem>>, vector<1x128xf32>
    %52 = vector.broadcast %51 : vector<1x128xf32> to vector<8x128xf32>
    %53 = arith.addf %50, %52 : vector<8x128xf32>
    %c0_41 = arith.constant 0 : index
    %c0_42 = arith.constant 0 : index
    %54 = vector.load %arg16[%c0_41, %c0_42] : memref<8x128xf32, #tpu.memory_space<vmem>>, vector<8x128xf32>
    tpu.vector_store %arg16[%c0_41, %c0_42], %53 {strides = array<i32>} : memref<8x128xf32, #tpu.memory_space<vmem>>, vector<8x128xf32>,
    return
  }
  func.func @transform_0(%arg0: i32) -> (i32, i32) {
    %c0_i32 = arith.constant 0 : i32
    %c0_i32_0 = arith.constant 0 : i32
    return %arg0, %c0_i32 : i32, i32
  }
  func.func @transform_1(%arg0: i32) -> (i32, i32) {
    %c0_i32 = arith.constant 0 : i32
    %c0_i32_0 = arith.constant 0 : i32
    %c0_i32_1 = arith.constant 0 : i32
    return %c0_i32, %c0_i32_0 : i32, i32
  }
  func.func @transform_2(%arg0: i32) -> (i32, i32) {
    %c0_i32 = arith.constant 0 : i32
    %c0_i32_0 = arith.constant 0 : i32
    %c0_i32_1 = arith.constant 0 : i32
    return %c0_i32, %c0_i32_0 : i32, i32
  }
  func.func @transform_3(%arg0: i32) -> (i32, i32) {
    %c0_i32 = arith.constant 0 : i32
    %c0_i32_0 = arith.constant 0 : i32
    %c0_i32_1 = arith.constant 0 : i32
    return %c0_i32, %c0_i32_0 : i32, i32
  }
  func.func @transform_4(%arg0: i32) -> (i32, i32) {
    %c0_i32 = arith.constant 0 : i32
    %c0_i32_0 = arith.constant 0 : i32
    %c0_i32_1 = arith.constant 0 : i32
    return %c0_i32, %c0_i32_0 : i32, i32
  }
  func.func @transform_5(%arg0: i32) -> (i32, i32) {
    %c0_i32 = arith.constant 0 : i32
    %c0_i32_0 = arith.constant 0 : i32
    %c0_i32_1 = arith.constant 0 : i32
    return %c0_i32, %c0_i32_0 : i32, i32
  }
  func.func @transform_6(%arg0: i32) -> (i32, i32) {
    %c0_i32 = arith.constant 0 : i32
    %c0_i32_0 = arith.constant 0 : i32
    %c0_i32_1 = arith.constant 0 : i32
    return %c0_i32, %c0_i32_0 : i32, i32
  }
  func.func @transform_7(%arg0: i32) -> (i32, i32) {
    %c0_i32 = arith.constant 0 : i32
    %c0_i32_0 = arith.constant 0 : i32
    %c0_i32_1 = arith.constant 0 : i32
    return %c0_i32, %c0_i32_0 : i32, i32
  }
  func.func @transform_8(%arg0: i32) -> (i32, i32) {
    %c0_i32 = arith.constant 0 : i32
    %c0_i32_0 = arith.constant 0 : i32
    %c0_i32_1 = arith.constant 0 : i32
    return %c0_i32, %c0_i32_0 : i32, i32
  }
  func.func @transform_9(%arg0: i32) -> (i32, i32) {
    %c0_i32 = arith.constant 0 : i32
    %c0_i32_0 = arith.constant 0 : i32
    %c0_i32_1 = arith.constant 0 : i32
    return %c0_i32, %c0_i32_0 : i32, i32
  }
  func.func @transform_10(%arg0: i32) -> (i32, i32) {
    %c0_i32 = arith.constant 0 : i32
    %c0_i32_0 = arith.constant 0 : i32
    %c0_i32_1 = arith.constant 0 : i32
    return %c0_i32, %c0_i32_0 : i32, i32
  }
  func.func @transform_11(%arg0: i32) -> (i32, i32) {
    %c0_i32 = arith.constant 0 : i32
    %c0_i32_0 = arith.constant 0 : i32
    %c0_i32_1 = arith.constant 0 : i32
    return %c0_i32, %c0_i32_0 : i32, i32
  }
  func.func @transform_12(%arg0: i32) -> (i32, i32) {
    %c0_i32 = arith.constant 0 : i32
    %c0_i32_0 = arith.constant 0 : i32
    %c0_i32_1 = arith.constant 0 : i32
    return %c0_i32, %c0_i32_0 : i32, i32
  }
  func.func @transform_13(%arg0: i32) -> (i32, i32) {
    %c0_i32 = arith.constant 0 : i32
    %c0_i32_0 = arith.constant 0 : i32
    %c0_i32_1 = arith.constant 0 : i32
    return %c0_i32, %c0_i32_0 : i32, i32
  }
  func.func @transform_14(%arg0: i32) -> (i32, i32) {
    %c0_i32 = arith.constant 0 : i32
    %c0_i32_0 = arith.constant 0 : i32
    %c0_i32_1 = arith.constant 0 : i32
    return %c0_i32, %c0_i32_0 : i32, i32
  }
  func.func @transform_15(%arg0: i32) -> (i32, i32) {
    %c0_i32 = arith.constant 0 : i32
    %c0_i32_0 = arith.constant 0 : i32
    return %arg0, %c0_i32 : i32, i32
  }
}

</mosaic_0001>

<llo_original>
// kernel: tpu_custom_call.1
$region0: #{tpu_custom_call.1}
  #allocation0 [shape = 'u32[]', space=smem, size = 0x4, offset = 0x4, fixed_abs, tag = 'smem constant byte address 0x4 - core index']
  #allocation1 [shape = 'u32[144,128]{1,0:T(1,128)}', space=vmem, size = 0x12000, scoped, tag = 'internal scratch']
  %s0 = inlined_call_operand.hbm [shape: bf16[8,128], index: 0, kind: input, shape index: {}]
  %s1 = inlined_call_operand.hbm [shape: bf16[128,128], index: 1, kind: input, shape index: {}]
  %s2 = inlined_call_operand.hbm [shape: bf16[128,128], index: 2, kind: input, shape index: {}]
  %s3 = inlined_call_operand.hbm [shape: bf16[128,128], index: 3, kind: input, shape index: {}]
  %s4 = inlined_call_operand.hbm [shape: bf16[128,128], index: 4, kind: input, shape index: {}]
  %s5 = inlined_call_operand.hbm [shape: bf16[128,128], index: 5, kind: input, shape index: {}]
  %s6 = inlined_call_operand.hbm [shape: bf16[128,128], index: 6, kind: input, shape index: {}]
  %s7 = inlined_call_operand.hbm [shape: bf16[128,128], index: 7, kind: input, shape index: {}]
  %s8 = inlined_call_operand.vmem [shape: f32[1,128], index: 8, kind: input, shape index: {}]
  %s9 = inlined_call_operand.vmem [shape: f32[1,128], index: 9, kind: input, shape index: {}]
  %s10 = inlined_call_operand.vmem [shape: f32[1,128], index: 10, kind: input, shape index: {}]
  %s11 = inlined_call_operand.vmem [shape: f32[1,128], index: 11, kind: input, shape index: {}]
  %s12 = inlined_call_operand.vmem [shape: f32[1,128], index: 12, kind: input, shape index: {}]
  %s13 = inlined_call_operand.vmem [shape: f32[1,128], index: 13, kind: input, shape index: {}]
  %s14 = inlined_call_operand.vmem [shape: f32[1,128], index: 14, kind: input, shape index: {}]
  %s15 = inlined_call_operand.hbm [shape: f32[8,128], index: 15, kind: output, shape index: {}]
  %s16 = sld [smem:[#allocation0]]
  $region102: #{tpu_custom_call.1} parent=0
    _
  %s18 = ssub.s32 1, %s16
  %s19 = scalar_select 0, %s18, %s16
  $region1: #{tpu_custom_call.1} parent=0
    #allocation2 [shape = 'u8[2048]{0}', space=vmem, size = 0x800, scoped, tag = 'input window, operand 0, single buffered']
    #allocation3 [shape = 's32[1]{0}', space=sflag, size = 0x4, scoped, tag = 'scoped memory for tpu_custom_call.1']
    #allocation4 [shape = 's32[1]{0}', space=sflag, size = 0x4, scoped, tag = 'scoped memory for tpu_custom_call.1']
    #allocation5 [shape = 'u8[32768]{0}', space=vmem, size = 0x8000, scoped, tag = 'input window, operand 1, single buffered']
    #allocation6 [shape = 's32[1]{0}', space=sflag, size = 0x4, scoped, tag = 'scoped memory for tpu_custom_call.1']
    #allocation7 [shape = 'u8[32768]{0}', space=vmem, size = 0x8000, scoped, tag = 'input window, operand 2, single buffered']
    #allocation8 [shape = 'u8[32768]{0}', space=vmem, size = 0x8000, scoped, tag = 'input window, operand 3, single buffered']
    #allocation9 [shape = 's32[1]{0}', space=sflag, size = 0x4, scoped, tag = 'scoped memory for tpu_custom_call.1']
    #allocation10 [shape = 'u8[32768]{0}', space=vmem, size = 0x8000, scoped, tag = 'input window, operand 4, single buffered']
    #allocation11 [shape = 'u8[32768]{0}', space=vmem, size = 0x8000, scoped, tag = 'input window, operand 5, single buffered']
    #allocation12 [shape = 's32[1]{0}', space=sflag, size = 0x4, scoped, tag = 'scoped memory for tpu_custom_call.1']
    #allocation13 [shape = 'u8[32768]{0}', space=vmem, size = 0x8000, scoped, tag = 'input window, operand 6, single buffered']
    #allocation14 [shape = 'u8[32768]{0}', space=vmem, size = 0x8000, scoped, tag = 'input window, operand 7, single buffered']
    #allocation15 [shape = 's32[1]{0}', space=sflag, size = 0x4, scoped, tag = 'scoped memory for tpu_custom_call.1']
    #allocation16 [shape = 'u8[4096]{0}', space=vmem, size = 0x1000, scoped, tag = 'output window, operand 0, single buffered']
    %20 = vsyncpa [#allocation3], 0
    %21 = vsyncpa [#allocation6], 0
    %22 = vsyncpa [#allocation9], 0
    %23 = vsyncpa [#allocation12], 0
    %24 = vsyncpa [#allocation15], 0
    %25 = vsyncpa [#allocation4], 0
    // Predicated region
    $region2: #{tpu_custom_call.1} parent=1 // pred_check
      _
    $region3: #{tpu_custom_call.1} parent=1 // pred_check_branch
      %27 = sbr.rel (0) target = $region5
    $region4: #{tpu_custom_call.1} parent=1 // pred_region
      %s29 = ssub.s32 64, 64
      %30 = vsyncadd [#allocation3], %s29
      %s32 = sshll.u32 [#allocation2], 4
      %s33 = int_to_ptr.vmem [resolvable:$true] %s32
      %35 = dma.hbm_to_vmem [thread:$0]  %s0, 64, %s33, [#allocation3]
    $region5: #{tpu_custom_call.1} parent=1 // pred_fallthru
      _
    // Predicated region
    $region6: #{tpu_custom_call.1} parent=1 // pred_check
      _
    $region7: #{tpu_custom_call.1} parent=1 // pred_check_branch
      %37 = sbr.rel (0) target = $region9
    $region8: #{tpu_custom_call.1} parent=1 // pred_region
      %s39 = ssub.s32 1024, 1024
      %40 = vsyncadd [#allocation6], %s39
      %s41 = sshll.u32 [#allocation5], 4
      %s42 = int_to_ptr.vmem [resolvable:$true] %s41
      %47 = dma.hbm_to_vmem [thread:$0]  %s1, 1024, %s42, [#allocation6], 64, 64, 4
    $region9: #{tpu_custom_call.1} parent=1 // pred_fallthru
      _
    // Predicated region
    $region10: #{tpu_custom_call.1} parent=1 // pred_check
      _
    $region11: #{tpu_custom_call.1} parent=1 // pred_check_branch
      %49 = sbr.rel (0) target = $region13
    $region12: #{tpu_custom_call.1} parent=1 // pred_region
      %s51 = ssub.s32 1024, 1024
      %52 = vsyncadd [#allocation6], %s51
      %s53 = sshll.u32 [#allocation7], 4
      %s54 = int_to_ptr.vmem [resolvable:$true] %s53
      %59 = dma.hbm_to_vmem [thread:$0]  %s2, 1024, %s54, [#allocation6], 64, 64, 4
    $region13: #{tpu_custom_call.1} parent=1 // pred_fallthru
      _
    // Predicated region
    $region14: #{tpu_custom_call.1} parent=1 // pred_check
      _
    $region15: #{tpu_custom_call.1} parent=1 // pred_check_branch
      %61 = sbr.rel (0) target = $region17
    $region16: #{tpu_custom_call.1} parent=1 // pred_region
      %s63 = ssub.s32 1024, 1024
      %64 = vsyncadd [#allocation9], %s63
      %s65 = sshll.u32 [#allocation8], 4
      %s66 = int_to_ptr.vmem [resolvable:$true] %s65
      %71 = dma.hbm_to_vmem [thread:$0]  %s3, 1024, %s66, [#allocation9], 64, 64, 4
    $region17: #{tpu_custom_call.1} parent=1 // pred_fallthru
      _
    // Predicated region
    $region18: #{tpu_custom_call.1} parent=1 // pred_check
      _
    $region19: #{tpu_custom_call.1} parent=1 // pred_check_branch
      %73 = sbr.rel (0) target = $region21
    $region20: #{tpu_custom_call.1} parent=1 // pred_region
      %s75 = ssub.s32 1024, 1024
      %76 = vsyncadd [#allocation9], %s75
      %s77 = sshll.u32 [#allocation10], 4
      %s78 = int_to_ptr.vmem [resolvable:$true] %s77
      %83 = dma.hbm_to_vmem [thread:$0]  %s4, 1024, %s78, [#allocation9], 64, 64, 4
    $region21: #{tpu_custom_call.1} parent=1 // pred_fallthru
      _
    // Predicated region
    $region22: #{tpu_custom_call.1} parent=1 // pred_check
      _
    $region23: #{tpu_custom_call.1} parent=1 // pred_check_branch
      %85 = sbr.rel (0) target = $region25
    $region24: #{tpu_custom_call.1} parent=1 // pred_region
      %s87 = ssub.s32 1024, 1024
      %88 = vsyncadd [#allocation12], %s87
      %s89 = sshll.u32 [#allocation11], 4
      %s90 = int_to_ptr.vmem [resolvable:$true] %s89
      %95 = dma.hbm_to_vmem [thread:$0]  %s5, 1024, %s90, [#allocation12], 64, 64, 4
    $region25: #{tpu_custom_call.1} parent=1 // pred_fallthru
      _
    // Predicated region
    $region26: #{tpu_custom_call.1} parent=1 // pred_check
      _
    $region27: #{tpu_custom_call.1} parent=1 // pred_check_branch
      %97 = sbr.rel (0) target = $region29
    $region28: #{tpu_custom_call.1} parent=1 // pred_region
      %s99 = ssub.s32 1024, 1024
      %100 = vsyncadd [#allocation12], %s99
      %s101 = sshll.u32 [#allocation13], 4
      %s102 = int_to_ptr.vmem [resolvable:$true] %s101
      %107 = dma.hbm_to_vmem [thread:$0]  %s6, 1024, %s102, [#allocation12], 64, 64, 4
    $region29: #{tpu_custom_call.1} parent=1 // pred_fallthru
      _
    // Predicated region
    $region30: #{tpu_custom_call.1} parent=1 // pred_check
      _
    $region31: #{tpu_custom_call.1} parent=1 // pred_check_branch
      %109 = sbr.rel (0) target = $region33
    $region32: #{tpu_custom_call.1} parent=1 // pred_region
      %s111 = ssub.s32 1024, 1024
      %112 = vsyncadd [#allocation15], %s111
      %s113 = sshll.u32 [#allocation14], 4
      %s114 = int_to_ptr.vmem [resolvable:$true] %s113
      %119 = dma.hbm_to_vmem [thread:$0]  %s7, 1024, %s114, [#allocation15], 64, 64, 4
    $region33: #{tpu_custom_call.1} parent=1 // pred_fallthru
      _
    // Predicated region
    $region34: #{tpu_custom_call.1} parent=1 // pred_check
      _
    $region35: #{tpu_custom_call.1} parent=1 // pred_check_branch
      %121 = sbr.rel (0) target = $region37
    $region36: #{tpu_custom_call.1} parent=1 // pred_region
      _
    $region37: #{tpu_custom_call.1} parent=1 // pred_fallthru
      _
    // Predicated region
    $region38: #{tpu_custom_call.1} parent=1 // pred_check
      _
    $region39: #{tpu_custom_call.1} parent=1 // pred_check_branch
      %123 = sbr.rel (0) target = $region41
    $region40: #{tpu_custom_call.1} parent=1 // pred_region
      _
    $region41: #{tpu_custom_call.1} parent=1 // pred_fallthru
      _
    // Predicated region
    $region42: #{tpu_custom_call.1} parent=1 // pred_check
      _
    $region43: #{tpu_custom_call.1} parent=1 // pred_check_branch
      %125 = sbr.rel (0) target = $region45
    $region44: #{tpu_custom_call.1} parent=1 // pred_region
      _
    $region45: #{tpu_custom_call.1} parent=1 // pred_fallthru
      _
    // Predicated region
    $region46: #{tpu_custom_call.1} parent=1 // pred_check
      _
    $region47: #{tpu_custom_call.1} parent=1 // pred_check_branch
      %127 = sbr.rel (0) target = $region49
    $region48: #{tpu_custom_call.1} parent=1 // pred_region
      _
    $region49: #{tpu_custom_call.1} parent=1 // pred_fallthru
      _
    // Predicated region
    $region50: #{tpu_custom_call.1} parent=1 // pred_check
      _
    $region51: #{tpu_custom_call.1} parent=1 // pred_check_branch
      %129 = sbr.rel (0) target = $region53
    $region52: #{tpu_custom_call.1} parent=1 // pred_region
      _
    $region53: #{tpu_custom_call.1} parent=1 // pred_fallthru
      _
    // Predicated region
    $region54: #{tpu_custom_call.1} parent=1 // pred_check
      _
    $region55: #{tpu_custom_call.1} parent=1 // pred_check_branch
      %131 = sbr.rel (0) target = $region57
    $region56: #{tpu_custom_call.1} parent=1 // pred_region
      _
    $region57: #{tpu_custom_call.1} parent=1 // pred_fallthru
      _
    // Predicated region
    $region58: #{tpu_custom_call.1} parent=1 // pred_check
      _
    $region59: #{tpu_custom_call.1} parent=1 // pred_check_branch
      %133 = sbr.rel (0) target = $region61
    $region60: #{tpu_custom_call.1} parent=1 // pred_region
      _
    $region61: #{tpu_custom_call.1} parent=1 // pred_fallthru
      _
    // Predicated region
    $region62: #{tpu_custom_call.1} parent=1 // pred_check
      _
    $region63: #{tpu_custom_call.1} parent=1 // pred_check_branch
      %135 = sbr.rel (0) target = $region65
    $region64: #{tpu_custom_call.1} parent=1 // pred_region
      %136 = dma.done [#allocation3], 64
    $region65: #{tpu_custom_call.1} parent=1 // pred_fallthru
      _
    // Predicated region
    $region66: #{tpu_custom_call.1} parent=1 // pred_check
      _
    $region67: #{tpu_custom_call.1} parent=1 // pred_check_branch
      %138 = sbr.rel (0) target = $region69
    $region68: #{tpu_custom_call.1} parent=1 // pred_region
      %139 = dma.done [#allocation6], 1024
    $region69: #{tpu_custom_call.1} parent=1 // pred_fallthru
      _
    // Predicated region
    $region70: #{tpu_custom_call.1} parent=1 // pred_check
      _
    $region71: #{tpu_custom_call.1} parent=1 // pred_check_branch
      %141 = sbr.rel (0) target = $region73
    $region72: #{tpu_custom_call.1} parent=1 // pred_region
      %142 = dma.done [#allocation6], 1024
    $region73: #{tpu_custom_call.1} parent=1 // pred_fallthru
      _
    // Predicated region
    $region74: #{tpu_custom_call.1} parent=1 // pred_check
      _
    $region75: #{tpu_custom_call.1} parent=1 // pred_check_branch
      %144 = sbr.rel (0) target = $region77
    $region76: #{tpu_custom_call.1} parent=1 // pred_region
      %145 = dma.done [#allocation9], 1024
    $region77: #{tpu_custom_call.1} parent=1 // pred_fallthru
      _
    // Predicated region
    $region78: #{tpu_custom_call.1} parent=1 // pred_check
      _
    $region79: #{tpu_custom_call.1} parent=1 // pred_check_branch
      %147 = sbr.rel (0) target = $region81
    $region80: #{tpu_custom_call.1} parent=1 // pred_region
      %148 = dma.done [#allocation9], 1024
    $region81: #{tpu_custom_call.1} parent=1 // pred_fallthru
      _
    // Predicated region
    $region82: #{tpu_custom_call.1} parent=1 // pred_check
      _
    $region83: #{tpu_custom_call.1} parent=1 // pred_check_branch
      %150 = sbr.rel (0) target = $region85
    $region84: #{tpu_custom_call.1} parent=1 // pred_region
      %151 = dma.done [#allocation12], 1024
    $region85: #{tpu_custom_call.1} parent=1 // pred_fallthru
      _
    // Predicated region
    $region86: #{tpu_custom_call.1} parent=1 // pred_check
      _
    $region87: #{tpu_custom_call.1} parent=1 // pred_check_branch
      %153 = sbr.rel (0) target = $region89
    $region88: #{tpu_custom_call.1} parent=1 // pred_region
      %154 = dma.done [#allocation12], 1024
    $region89: #{tpu_custom_call.1} parent=1 // pred_fallthru
      _
    // Predicated region
    $region90: #{tpu_custom_call.1} parent=1 // pred_check
      _
    $region91: #{tpu_custom_call.1} parent=1 // pred_check_branch
      %156 = sbr.rel (0) target = $region93
    $region92: #{tpu_custom_call.1} parent=1 // pred_region
      %157 = dma.done [#allocation15], 1024
    $region93: #{tpu_custom_call.1} parent=1 // pred_fallthru
      _
    %v159 = vld [vmem:[#allocation2] sm:$0xf]
    %v160 = vld [vmem:[#allocation5] sm:$0xf]
    %v161 = vld [vmem:[#allocation5 + $0x4] sm:$0xf]
    %v162 = vld [vmem:[#allocation5 + $0x8] sm:$0xf]
    %v163 = vld [vmem:[#allocation5 + $0xc] sm:$0xf]
    %v164 = vld [vmem:[#allocation5 + $0x10] sm:$0xf]
    %v165 = vld [vmem:[#allocation5 + $0x14] sm:$0xf]
    %v166 = vld [vmem:[#allocation5 + $0x18] sm:$0xf]
    %v167 = vld [vmem:[#allocation5 + $0x1c] sm:$0xf]
    %v168 = vld [vmem:[#allocation5 + $0x20] sm:$0xf]
    %v169 = vld [vmem:[#allocation5 + $0x24] sm:$0xf]
    %v170 = vld [vmem:[#allocation5 + $0x28] sm:$0xf]
    %v171 = vld [vmem:[#allocation5 + $0x2c] sm:$0xf]
    %v172 = vld [vmem:[#allocation5 + $0x30] sm:$0xf]
    %v173 = vld [vmem:[#allocation5 + $0x34] sm:$0xf]
    %v174 = vld [vmem:[#allocation5 + $0x38] sm:$0xf]
    %v175 = vld [vmem:[#allocation5 + $0x3c] sm:$0xf]
    %v176 = vld [vmem:[%s8] sm:$0x1]
    %v178 = vlaneseq
    %v179 = vshrl.u32 %v178, 7
    %v180 = vsub.s32 0, %v179
    %v181 = vrot.slane %v176, %v180
    %v199 = vunpack.c.l.b16 %v160
    %v200 = vunpack.c.l.b16 %v161
    %v201 = vunpack.c.l.b16 %v162
    %v202 = vunpack.c.l.b16 %v163
    %v203 = vunpack.c.l.b16 %v164
    %v204 = vunpack.c.l.b16 %v165
    %v205 = vunpack.c.l.b16 %v166
    %v206 = vunpack.c.l.b16 %v167
    %v207 = vunpack.c.l.b16 %v168
    %v208 = vunpack.c.l.b16 %v169
    %v209 = vunpack.c.l.b16 %v170
    %v210 = vunpack.c.l.b16 %v171
    %v211 = vunpack.c.l.b16 %v172
    %v212 = vunpack.c.l.b16 %v173
    %v213 = vunpack.c.l.b16 %v174
    %v214 = vunpack.c.l.b16 %v175
    %v215 = vpack.c.b16 %v200, %v199
    %v216 = vpack.c.b16 %v202, %v201
    %v217 = vpack.c.b16 %v204, %v203
    %v218 = vpack.c.b16 %v206, %v205
    %v219 = vpack.c.b16 %v208, %v207
    %v220 = vpack.c.b16 %v210, %v209
    %v221 = vpack.c.b16 %v212, %v211
    %v222 = vpack.c.b16 %v214, %v213
    %231 = vmatprep.subr.bf16.mxu0 0
    %232 = vmatpush1.bf16.msra.mxu0 %v215
    %233 = vmatprep.subr.bf16.mxu0 0
    %234 = vmatpush1.bf16.msra.mxu0 %v216
    %235 = vmatprep.subr.bf16.mxu0 0
    %236 = vmatpush1.bf16.msra.mxu0 %v217
    %237 = vmatprep.subr.bf16.mxu0 0
    %238 = vmatpush1.bf16.msra.mxu0 %v218
    %239 = vmatprep.subr.bf16.mxu0 0
    %240 = vmatpush1.bf16.msra.mxu0 %v219
    %241 = vmatprep.subr.bf16.mxu0 0
    %242 = vmatpush1.bf16.msra.mxu0 %v220
    %243 = vmatprep.subr.bf16.mxu0 0
    %244 = vmatpush1.bf16.msra.mxu0 %v221
    %245 = vmatprep.subr.bf16.mxu0 0
    %246 = vmatpush1.bf16.msra.mxu0 %v222
    %247 = vmatprep.subr.bf16.mxu0 0
    %248 = vmatpush1.bf16.msra.mxu0 0
    %249 = vmatprep.subr.bf16.mxu0 0
    %250 = vmatpush1.bf16.msra.mxu0 0
    %251 = vmatprep.subr.bf16.mxu0 0
    %252 = vmatpush1.bf16.msra.mxu0 0
    %253 = vmatprep.subr.bf16.mxu0 0
    %254 = vmatpush1.bf16.msra.mxu0 0
    %255 = vmatprep.subr.bf16.mxu0 0
    %256 = vmatpush1.bf16.msra.mxu0 0
    %257 = vmatprep.subr.bf16.mxu0 0
    %258 = vmatpush1.bf16.msra.mxu0 0
    %259 = vmatprep.subr.bf16.mxu0 0
    %260 = vmatpush1.bf16.msra.mxu0 0
    %261 = vmatprep.subr.bf16.mxu0 0
    %262 = vmatpush1.bf16.msra.mxu0 0
    %263 = vmatprep.mubr.bf16.mxu0 0
    %264 = vmatmul.mubr.bf16.gmra.mrb[0].mxu0 %v159
    %v265 = vpop.f32.mrb[0].mxu0
    %v266 = vadd.f32 %v181, %v265
    %v267 = vpop.f32.mrb[0].mxu0
    %v268 = vpop.f32.mrb[0].mxu0
    %v269 = vpop.f32.mrb[0].mxu0
    %270 = vdwg.mxu0
    %v271 = vmax.f32 %v266, 0.0
    %v272 = vpack.c.bf16 %v271, %v271
    %v273 = vld [vmem:[#allocation7] sm:$0xf]
    %v274 = vld [vmem:[#allocation7 + $0x4] sm:$0xf]
    %v275 = vld [vmem:[#allocation7 + $0x8] sm:$0xf]
    %v276 = vld [vmem:[#allocation7 + $0xc] sm:$0xf]
    %v277 = vld [vmem:[#allocation7 + $0x10] sm:$0xf]
    %v278 = vld [vmem:[#allocation7 + $0x14] sm:$0xf]
    %v279 = vld [vmem:[#allocation7 + $0x18] sm:$0xf]
    %v280 = vld [vmem:[#allocation7 + $0x1c] sm:$0xf]
    %v281 = vld [vmem:[#allocation7 + $0x20] sm:$0xf]
    %v282 = vld [vmem:[#allocation7 + $0x24] sm:$0xf]
    %v283 = vld [vmem:[#allocation7 + $0x28] sm:$0xf]
    %v284 = vld [vmem:[#allocation7 + $0x2c] sm:$0xf]
    %v285 = vld [vmem:[#allocation7 + $0x30] sm:$0xf]
    %v286 = vld [vmem:[#allocation7 + $0x34] sm:$0xf]
    %v287 = vld [vmem:[#allocation7 + $0x38] sm:$0xf]
    %v288 = vld [vmem:[#allocation7 + $0x3c] sm:$0xf]
    %v289 = vld [vmem:[%s9] sm:$0x1]
    %v291 = vlaneseq
    %v292 = vshrl.u32 %v291, 7
    %v293 = vsub.s32 0, %v292
    %v294 = vrot.slane %v289, %v293
    %v312 = vunpack.c.l.b16 %v273
    %v313 = vunpack.c.l.b16 %v274
    %v314 = vunpack.c.l.b16 %v275
    %v315 = vunpack.c.l.b16 %v276
    %v316 = vunpack.c.l.b16 %v277
    %v317 = vunpack.c.l.b16 %v278
    %v318 = vunpack.c.l.b16 %v279
    %v319 = vunpack.c.l.b16 %v280
    %v320 = vunpack.c.l.b16 %v281
    %v321 = vunpack.c.l.b16 %v282
    %v322 = vunpack.c.l.b16 %v283
    %v323 = vunpack.c.l.b16 %v284
    %v324 = vunpack.c.l.b16 %v285
    %v325 = vunpack.c.l.b16 %v286
    %v326 = vunpack.c.l.b16 %v287
    %v327 = vunpack.c.l.b16 %v288
    %v328 = vpack.c.b16 %v313, %v312
    %v329 = vpack.c.b16 %v315, %v314
    %v330 = vpack.c.b16 %v317, %v316
    %v331 = vpack.c.b16 %v319, %v318
    %v332 = vpack.c.b16 %v321, %v320
    %v333 = vpack.c.b16 %v323, %v322
    %v334 = vpack.c.b16 %v325, %v324
    %v335 = vpack.c.b16 %v327, %v326
    %344 = vmatprep.subr.bf16.mxu0 0
    %345 = vmatpush1.bf16.msra.mxu0 %v328
    %346 = vmatprep.subr.bf16.mxu0 0
    %347 = vmatpush1.bf16.msra.mxu0 %v329
    %348 = vmatprep.subr.bf16.mxu0 0
    %349 = vmatpush1.bf16.msra.mxu0 %v330
    %350 = vmatprep.subr.bf16.mxu0 0
    %351 = vmatpush1.bf16.msra.mxu0 %v331
    %352 = vmatprep.subr.bf16.mxu0 0
    %353 = vmatpush1.bf16.msra.mxu0 %v332
    %354 = vmatprep.subr.bf16.mxu0 0
    %355 = vmatpush1.bf16.msra.mxu0 %v333
    %356 = vmatprep.subr.bf16.mxu0 0
    %357 = vmatpush1.bf16.msra.mxu0 %v334
    %358 = vmatprep.subr.bf16.mxu0 0
    %359 = vmatpush1.bf16.msra.mxu0 %v335
    %360 = vmatprep.subr.bf16.mxu0 0
    %361 = vmatpush1.bf16.msra.mxu0 0
    %362 = vmatprep.subr.bf16.mxu0 0
    %363 = vmatpush1.bf16.msra.mxu0 0
    %364 = vmatprep.subr.bf16.mxu0 0
    %365 = vmatpush1.bf16.msra.mxu0 0
    %366 = vmatprep.subr.bf16.mxu0 0
    %367 = vmatpush1.bf16.msra.mxu0 0
    %368 = vmatprep.subr.bf16.mxu0 0
    %369 = vmatpush1.bf16.msra.mxu0 0
    %370 = vmatprep.subr.bf16.mxu0 0
    %371 = vmatpush1.bf16.msra.mxu0 0
    %372 = vmatprep.subr.bf16.mxu0 0
    %373 = vmatpush1.bf16.msra.mxu0 0
    %374 = vmatprep.subr.bf16.mxu0 0
    %375 = vmatpush1.bf16.msra.mxu0 0
    %376 = vmatprep.mubr.bf16.mxu0 0
    %377 = vmatmul.mubr.bf16.gmra.mrb[0].mxu0 %v272
    %v378 = vpop.f32.mrb[0].mxu0
    %v379 = vadd.f32 %v294, %v378
    %v380 = vpop.f32.mrb[0].mxu0
    %v381 = vpop.f32.mrb[0].mxu0
    %v382 = vpop.f32.mrb[0].mxu0
    %383 = vdwg.mxu0
    %v384 = vmax.f32 %v379, 0.0
    %v385 = vpack.c.bf16 %v384, %v384
    %v386 = vld [vmem:[#allocation8] sm:$0xf]
    %v387 = vld [vmem:[#allocation8 + $0x4] sm:$0xf]
    %v388 = vld [vmem:[#allocation8 + $0x8] sm:$0xf]
    %v389 = vld [vmem:[#allocation8 + $0xc] sm:$0xf]
    %v390 = vld [vmem:[#allocation8 + $0x10] sm:$0xf]
    %v391 = vld [vmem:[#allocation8 + $0x14] sm:$0xf]
    %v392 = vld [vmem:[#allocation8 + $0x18] sm:$0xf]
    %v393 = vld [vmem:[#allocation8 + $0x1c] sm:$0xf]
    %v394 = vld [vmem:[#allocation8 + $0x20] sm:$0xf]
    %v395 = vld [vmem:[#allocation8 + $0x24] sm:$0xf]
    %v396 = vld [vmem:[#allocation8 + $0x28] sm:$0xf]
    %v397 = vld [vmem:[#allocation8 + $0x2c] sm:$0xf]
    %v398 = vld [vmem:[#allocation8 + $0x30] sm:$0xf]
    %v399 = vld [vmem:[#allocation8 + $0x34] sm:$0xf]
    %v400 = vld [vmem:[#allocation8 + $0x38] sm:$0xf]
    %v401 = vld [vmem:[#allocation8 + $0x3c] sm:$0xf]
    %v402 = vld [vmem:[%s10] sm:$0x1]
    %v404 = vlaneseq
    %v405 = vshrl.u32 %v404, 7
    %v406 = vsub.s32 0, %v405
    %v407 = vrot.slane %v402, %v406
    %v425 = vunpack.c.l.b16 %v386
    %v426 = vunpack.c.l.b16 %v387
    %v427 = vunpack.c.l.b16 %v388
    %v428 = vunpack.c.l.b16 %v389
    %v429 = vunpack.c.l.b16 %v390
    %v430 = vunpack.c.l.b16 %v391
    %v431 = vunpack.c.l.b16 %v392
    %v432 = vunpack.c.l.b16 %v393
    %v433 = vunpack.c.l.b16 %v394
    %v434 = vunpack.c.l.b16 %v395
    %v435 = vunpack.c.l.b16 %v396
    %v436 = vunpack.c.l.b16 %v397
    %v437 = vunpack.c.l.b16 %v398
    %v438 = vunpack.c.l.b16 %v399
    %v439 = vunpack.c.l.b16 %v400
    %v440 = vunpack.c.l.b16 %v401
    %v441 = vpack.c.b16 %v426, %v425
    %v442 = vpack.c.b16 %v428, %v427
    %v443 = vpack.c.b16 %v430, %v429
    %v444 = vpack.c.b16 %v432, %v431
    %v445 = vpack.c.b16 %v434, %v433
    %v446 = vpack.c.b16 %v436, %v435
    %v447 = vpack.c.b16 %v438, %v437
    %v448 = vpack.c.b16 %v440, %v439
    %457 = vmatprep.subr.bf16.mxu0 0
    %458 = vmatpush1.bf16.msra.mxu0 %v441
    %459 = vmatprep.subr.bf16.mxu0 0
    %460 = vmatpush1.bf16.msra.mxu0 %v442
    %461 = vmatprep.subr.bf16.mxu0 0
    %462 = vmatpush1.bf16.msra.mxu0 %v443
    %463 = vmatprep.subr.bf16.mxu0 0
    %464 = vmatpush1.bf16.msra.mxu0 %v444
    %465 = vmatprep.subr.bf16.mxu0 0
    %466 = vmatpush1.bf16.msra.mxu0 %v445
    %467 = vmatprep.subr.bf16.mxu0 0
    %468 = vmatpush1.bf16.msra.mxu0 %v446
    %469 = vmatprep.subr.bf16.mxu0 0
    %470 = vmatpush1.bf16.msra.mxu0 %v447
    %471 = vmatprep.subr.bf16.mxu0 0
    %472 = vmatpush1.bf16.msra.mxu0 %v448
    %473 = vmatprep.subr.bf16.mxu0 0
    %474 = vmatpush1.bf16.msra.mxu0 0
    %475 = vmatprep.subr.bf16.mxu0 0
    %476 = vmatpush1.bf16.msra.mxu0 0
    %477 = vmatprep.subr.bf16.mxu0 0
    %478 = vmatpush1.bf16.msra.mxu0 0
    %479 = vmatprep.subr.bf16.mxu0 0
    %480 = vmatpush1.bf16.msra.mxu0 0
    %481 = vmatprep.subr.bf16.mxu0 0
    %482 = vmatpush1.bf16.msra.mxu0 0
    %483 = vmatprep.subr.bf16.mxu0 0
    %484 = vmatpush1.bf16.msra.mxu0 0
    %485 = vmatprep.subr.bf16.mxu0 0
    %486 = vmatpush1.bf16.msra.mxu0 0
    %487 = vmatprep.subr.bf16.mxu0 0
    %488 = vmatpush1.bf16.msra.mxu0 0
    %489 = vmatprep.mubr.bf16.mxu0 0
    %490 = vmatmul.mubr.bf16.gmra.mrb[0].mxu0 %v385
    %v491 = vpop.f32.mrb[0].mxu0
    %v492 = vadd.f32 %v407, %v491
    %v493 = vpop.f32.mrb[0].mxu0
    %v494 = vpop.f32.mrb[0].mxu0
    %v495 = vpop.f32.mrb[0].mxu0
    %496 = vdwg.mxu0
    %v497 = vmax.f32 %v492, 0.0
    %v498 = vpack.c.bf16 %v497, %v497
    %v499 = vld [vmem:[#allocation10] sm:$0xf]
    %v500 = vld [vmem:[#allocation10 + $0x4] sm:$0xf]
    %v501 = vld [vmem:[#allocation10 + $0x8] sm:$0xf]
    %v502 = vld [vmem:[#allocation10 + $0xc] sm:$0xf]
    %v503 = vld [vmem:[#allocation10 + $0x10] sm:$0xf]
    %v504 = vld [vmem:[#allocation10 + $0x14] sm:$0xf]
    %v505 = vld [vmem:[#allocation10 + $0x18] sm:$0xf]
    %v506 = vld [vmem:[#allocation10 + $0x1c] sm:$0xf]
    %v507 = vld [vmem:[#allocation10 + $0x20] sm:$0xf]
    %v508 = vld [vmem:[#allocation10 + $0x24] sm:$0xf]
    %v509 = vld [vmem:[#allocation10 + $0x28] sm:$0xf]
    %v510 = vld [vmem:[#allocation10 + $0x2c] sm:$0xf]
    %v511 = vld [vmem:[#allocation10 + $0x30] sm:$0xf]
    %v512 = vld [vmem:[#allocation10 + $0x34] sm:$0xf]
    %v513 = vld [vmem:[#allocation10 + $0x38] sm:$0xf]
    %v514 = vld [vmem:[#allocation10 + $0x3c] sm:$0xf]
    %v515 = vld [vmem:[%s11] sm:$0x1]
    %v517 = vlaneseq
    %v518 = vshrl.u32 %v517, 7
    %v519 = vsub.s32 0, %v518
    %v520 = vrot.slane %v515, %v519
    %v538 = vunpack.c.l.b16 %v499
    %v539 = vunpack.c.l.b16 %v500
    %v540 = vunpack.c.l.b16 %v501
    %v541 = vunpack.c.l.b16 %v502
    %v542 = vunpack.c.l.b16 %v503
    %v543 = vunpack.c.l.b16 %v504
    %v544 = vunpack.c.l.b16 %v505
    %v545 = vunpack.c.l.b16 %v506
    %v546 = vunpack.c.l.b16 %v507
    %v547 = vunpack.c.l.b16 %v508
    %v548 = vunpack.c.l.b16 %v509
    %v549 = vunpack.c.l.b16 %v510
    %v550 = vunpack.c.l.b16 %v511
    %v551 = vunpack.c.l.b16 %v512
    %v552 = vunpack.c.l.b16 %v513
    %v553 = vunpack.c.l.b16 %v514
    %v554 = vpack.c.b16 %v539, %v538
    %v555 = vpack.c.b16 %v541, %v540
    %v556 = vpack.c.b16 %v543, %v542
    %v557 = vpack.c.b16 %v545, %v544
    %v558 = vpack.c.b16 %v547, %v546
    %v559 = vpack.c.b16 %v549, %v548
    %v560 = vpack.c.b16 %v551, %v550
    %v561 = vpack.c.b16 %v553, %v552
    %570 = vmatprep.subr.bf16.mxu0 0
    %571 = vmatpush1.bf16.msra.mxu0 %v554
    %572 = vmatprep.subr.bf16.mxu0 0
    %573 = vmatpush1.bf16.msra.mxu0 %v555
    %574 = vmatprep.subr.bf16.mxu0 0
    %575 = vmatpush1.bf16.msra.mxu0 %v556
    %576 = vmatprep.subr.bf16.mxu0 0
    %577 = vmatpush1.bf16.msra.mxu0 %v557
    %578 = vmatprep.subr.bf16.mxu0 0
    %579 = vmatpush1.bf16.msra.mxu0 %v558
    %580 = vmatprep.subr.bf16.mxu0 0
    %581 = vmatpush1.bf16.msra.mxu0 %v559
    %582 = vmatprep.subr.bf16.mxu0 0
    %583 = vmatpush1.bf16.msra.mxu0 %v560
    %584 = vmatprep.subr.bf16.mxu0 0
    %585 = vmatpush1.bf16.msra.mxu0 %v561
    %586 = vmatprep.subr.bf16.mxu0 0
    %587 = vmatpush1.bf16.msra.mxu0 0
    %588 = vmatprep.subr.bf16.mxu0 0
    %589 = vmatpush1.bf16.msra.mxu0 0
    %590 = vmatprep.subr.bf16.mxu0 0
    %591 = vmatpush1.bf16.msra.mxu0 0
    %592 = vmatprep.subr.bf16.mxu0 0
    %593 = vmatpush1.bf16.msra.mxu0 0
    %594 = vmatprep.subr.bf16.mxu0 0
    %595 = vmatpush1.bf16.msra.mxu0 0
    %596 = vmatprep.subr.bf16.mxu0 0
    %597 = vmatpush1.bf16.msra.mxu0 0
    %598 = vmatprep.subr.bf16.mxu0 0
    %599 = vmatpush1.bf16.msra.mxu0 0
    %600 = vmatprep.subr.bf16.mxu0 0
    %601 = vmatpush1.bf16.msra.mxu0 0
    %602 = vmatprep.mubr.bf16.mxu0 0
    %603 = vmatmul.mubr.bf16.gmra.mrb[0].mxu0 %v498
    %v604 = vpop.f32.mrb[0].mxu0
    %v605 = vadd.f32 %v520, %v604
    %v606 = vpop.f32.mrb[0].mxu0
    %v607 = vpop.f32.mrb[0].mxu0
    %v608 = vpop.f32.mrb[0].mxu0
    %609 = vdwg.mxu0
    %v610 = vmax.f32 %v605, 0.0
    %v611 = vpack.c.bf16 %v610, %v610
    %v612 = vld [vmem:[#allocation11] sm:$0xf]
    %v613 = vld [vmem:[#allocation11 + $0x4] sm:$0xf]
    %v614 = vld [vmem:[#allocation11 + $0x8] sm:$0xf]
    %v615 = vld [vmem:[#allocation11 + $0xc] sm:$0xf]
    %v616 = vld [vmem:[#allocation11 + $0x10] sm:$0xf]
    %v617 = vld [vmem:[#allocation11 + $0x14] sm:$0xf]
    %v618 = vld [vmem:[#allocation11 + $0x18] sm:$0xf]
    %v619 = vld [vmem:[#allocation11 + $0x1c] sm:$0xf]
    %v620 = vld [vmem:[#allocation11 + $0x20] sm:$0xf]
    %v621 = vld [vmem:[#allocation11 + $0x24] sm:$0xf]
    %v622 = vld [vmem:[#allocation11 + $0x28] sm:$0xf]
    %v623 = vld [vmem:[#allocation11 + $0x2c] sm:$0xf]
    %v624 = vld [vmem:[#allocation11 + $0x30] sm:$0xf]
    %v625 = vld [vmem:[#allocation11 + $0x34] sm:$0xf]
    %v626 = vld [vmem:[#allocation11 + $0x38] sm:$0xf]
    %v627 = vld [vmem:[#allocation11 + $0x3c] sm:$0xf]
    %v628 = vld [vmem:[%s12] sm:$0x1]
    %v630 = vlaneseq
    %v631 = vshrl.u32 %v630, 7
    %v632 = vsub.s32 0, %v631
    %v633 = vrot.slane %v628, %v632
    %v651 = vunpack.c.l.b16 %v612
    %v652 = vunpack.c.l.b16 %v613
    %v653 = vunpack.c.l.b16 %v614
    %v654 = vunpack.c.l.b16 %v615
    %v655 = vunpack.c.l.b16 %v616
    %v656 = vunpack.c.l.b16 %v617
    %v657 = vunpack.c.l.b16 %v618
    %v658 = vunpack.c.l.b16 %v619
    %v659 = vunpack.c.l.b16 %v620
    %v660 = vunpack.c.l.b16 %v621
    %v661 = vunpack.c.l.b16 %v622
    %v662 = vunpack.c.l.b16 %v623
    %v663 = vunpack.c.l.b16 %v624
    %v664 = vunpack.c.l.b16 %v625
    %v665 = vunpack.c.l.b16 %v626
    %v666 = vunpack.c.l.b16 %v627
    %v667 = vpack.c.b16 %v652, %v651
    %v668 = vpack.c.b16 %v654, %v653
    %v669 = vpack.c.b16 %v656, %v655
    %v670 = vpack.c.b16 %v658, %v657
    %v671 = vpack.c.b16 %v660, %v659
    %v672 = vpack.c.b16 %v662, %v661
    %v673 = vpack.c.b16 %v664, %v663
    %v674 = vpack.c.b16 %v666, %v665
    %683 = vmatprep.subr.bf16.mxu0 0
    %684 = vmatpush1.bf16.msra.mxu0 %v667
    %685 = vmatprep.subr.bf16.mxu0 0
    %686 = vmatpush1.bf16.msra.mxu0 %v668
    %687 = vmatprep.subr.bf16.mxu0 0
    %688 = vmatpush1.bf16.msra.mxu0 %v669
    %689 = vmatprep.subr.bf16.mxu0 0
    %690 = vmatpush1.bf16.msra.mxu0 %v670
    %691 = vmatprep.subr.bf16.mxu0 0
    %692 = vmatpush1.bf16.msra.mxu0 %v671
    %693 = vmatprep.subr.bf16.mxu0 0
    %694 = vmatpush1.bf16.msra.mxu0 %v672
    %695 = vmatprep.subr.bf16.mxu0 0
    %696 = vmatpush1.bf16.msra.mxu0 %v673
    %697 = vmatprep.subr.bf16.mxu0 0
    %698 = vmatpush1.bf16.msra.mxu0 %v674
    %699 = vmatprep.subr.bf16.mxu0 0
    %700 = vmatpush1.bf16.msra.mxu0 0
    %701 = vmatprep.subr.bf16.mxu0 0
    %702 = vmatpush1.bf16.msra.mxu0 0
    %703 = vmatprep.subr.bf16.mxu0 0
    %704 = vmatpush1.bf16.msra.mxu0 0
    %705 = vmatprep.subr.bf16.mxu0 0
    %706 = vmatpush1.bf16.msra.mxu0 0
    %707 = vmatprep.subr.bf16.mxu0 0
    %708 = vmatpush1.bf16.msra.mxu0 0
    %709 = vmatprep.subr.bf16.mxu0 0
    %710 = vmatpush1.bf16.msra.mxu0 0
    %711 = vmatprep.subr.bf16.mxu0 0
    %712 = vmatpush1.bf16.msra.mxu0 0
    %713 = vmatprep.subr.bf16.mxu0 0
    %714 = vmatpush1.bf16.msra.mxu0 0
    %715 = vmatprep.mubr.bf16.mxu0 0
    %716 = vmatmul.mubr.bf16.gmra.mrb[0].mxu0 %v611
    %v717 = vpop.f32.mrb[0].mxu0
    %v718 = vadd.f32 %v633, %v717
    %v719 = vpop.f32.mrb[0].mxu0
    %v720 = vpop.f32.mrb[0].mxu0
    %v721 = vpop.f32.mrb[0].mxu0
    %722 = vdwg.mxu0
    %v723 = vmax.f32 %v718, 0.0
    %v724 = vpack.c.bf16 %v723, %v723
    %v725 = vld [vmem:[#allocation13] sm:$0xf]
    %v726 = vld [vmem:[#allocation13 + $0x4] sm:$0xf]
    %v727 = vld [vmem:[#allocation13 + $0x8] sm:$0xf]
    %v728 = vld [vmem:[#allocation13 + $0xc] sm:$0xf]
    %v729 = vld [vmem:[#allocation13 + $0x10] sm:$0xf]
    %v730 = vld [vmem:[#allocation13 + $0x14] sm:$0xf]
    %v731 = vld [vmem:[#allocation13 + $0x18] sm:$0xf]
    %v732 = vld [vmem:[#allocation13 + $0x1c] sm:$0xf]
    %v733 = vld [vmem:[#allocation13 + $0x20] sm:$0xf]
    %v734 = vld [vmem:[#allocation13 + $0x24] sm:$0xf]
    %v735 = vld [vmem:[#allocation13 + $0x28] sm:$0xf]
    %v736 = vld [vmem:[#allocation13 + $0x2c] sm:$0xf]
    %v737 = vld [vmem:[#allocation13 + $0x30] sm:$0xf]
    %v738 = vld [vmem:[#allocation13 + $0x34] sm:$0xf]
    %v739 = vld [vmem:[#allocation13 + $0x38] sm:$0xf]
    %v740 = vld [vmem:[#allocation13 + $0x3c] sm:$0xf]
    %v741 = vld [vmem:[%s13] sm:$0x1]
    %v743 = vlaneseq
    %v744 = vshrl.u32 %v743, 7
    %v745 = vsub.s32 0, %v744
    %v746 = vrot.slane %v741, %v745
    %v764 = vunpack.c.l.b16 %v725
    %v765 = vunpack.c.l.b16 %v726
    %v766 = vunpack.c.l.b16 %v727
    %v767 = vunpack.c.l.b16 %v728
    %v768 = vunpack.c.l.b16 %v729
    %v769 = vunpack.c.l.b16 %v730
    %v770 = vunpack.c.l.b16 %v731
    %v771 = vunpack.c.l.b16 %v732
    %v772 = vunpack.c.l.b16 %v733
    %v773 = vunpack.c.l.b16 %v734
    %v774 = vunpack.c.l.b16 %v735
    %v775 = vunpack.c.l.b16 %v736
    %v776 = vunpack.c.l.b16 %v737
    %v777 = vunpack.c.l.b16 %v738
    %v778 = vunpack.c.l.b16 %v739
    %v779 = vunpack.c.l.b16 %v740
    %v780 = vpack.c.b16 %v765, %v764
    %v781 = vpack.c.b16 %v767, %v766
    %v782 = vpack.c.b16 %v769, %v768
    %v783 = vpack.c.b16 %v771, %v770
    %v784 = vpack.c.b16 %v773, %v772
    %v785 = vpack.c.b16 %v775, %v774
    %v786 = vpack.c.b16 %v777, %v776
    %v787 = vpack.c.b16 %v779, %v778
    %796 = vmatprep.subr.bf16.mxu0 0
    %797 = vmatpush1.bf16.msra.mxu0 %v780
    %798 = vmatprep.subr.bf16.mxu0 0
    %799 = vmatpush1.bf16.msra.mxu0 %v781
    %800 = vmatprep.subr.bf16.mxu0 0
    %801 = vmatpush1.bf16.msra.mxu0 %v782
    %802 = vmatprep.subr.bf16.mxu0 0
    %803 = vmatpush1.bf16.msra.mxu0 %v783
    %804 = vmatprep.subr.bf16.mxu0 0
    %805 = vmatpush1.bf16.msra.mxu0 %v784
    %806 = vmatprep.subr.bf16.mxu0 0
    %807 = vmatpush1.bf16.msra.mxu0 %v785
    %808 = vmatprep.subr.bf16.mxu0 0
    %809 = vmatpush1.bf16.msra.mxu0 %v786
    %810 = vmatprep.subr.bf16.mxu0 0
    %811 = vmatpush1.bf16.msra.mxu0 %v787
    %812 = vmatprep.subr.bf16.mxu0 0
    %813 = vmatpush1.bf16.msra.mxu0 0
    %814 = vmatprep.subr.bf16.mxu0 0
    %815 = vmatpush1.bf16.msra.mxu0 0
    %816 = vmatprep.subr.bf16.mxu0 0
    %817 = vmatpush1.bf16.msra.mxu0 0
    %818 = vmatprep.subr.bf16.mxu0 0
    %819 = vmatpush1.bf16.msra.mxu0 0
    %820 = vmatprep.subr.bf16.mxu0 0
    %821 = vmatpush1.bf16.msra.mxu0 0
    %822 = vmatprep.subr.bf16.mxu0 0
    %823 = vmatpush1.bf16.msra.mxu0 0
    %824 = vmatprep.subr.bf16.mxu0 0
    %825 = vmatpush1.bf16.msra.mxu0 0
    %826 = vmatprep.subr.bf16.mxu0 0
    %827 = vmatpush1.bf16.msra.mxu0 0
    %828 = vmatprep.mubr.bf16.mxu0 0
    %829 = vmatmul.mubr.bf16.gmra.mrb[0].mxu0 %v724
    %v830 = vpop.f32.mrb[0].mxu0
    %v831 = vadd.f32 %v746, %v830
    %v832 = vpop.f32.mrb[0].mxu0
    %v833 = vpop.f32.mrb[0].mxu0
    %v834 = vpop.f32.mrb[0].mxu0
    %835 = vdwg.mxu0
    %v836 = vmax.f32 %v831, 0.0
    %v837 = vpack.c.bf16 %v836, %v836
    %v838 = vld [vmem:[#allocation14] sm:$0xf]
    %v839 = vld [vmem:[#allocation14 + $0x4] sm:$0xf]
    %v840 = vld [vmem:[#allocation14 + $0x8] sm:$0xf]
    %v841 = vld [vmem:[#allocation14 + $0xc] sm:$0xf]
    %v842 = vld [vmem:[#allocation14 + $0x10] sm:$0xf]
    %v843 = vld [vmem:[#allocation14 + $0x14] sm:$0xf]
    %v844 = vld [vmem:[#allocation14 + $0x18] sm:$0xf]
    %v845 = vld [vmem:[#allocation14 + $0x1c] sm:$0xf]
    %v846 = vld [vmem:[#allocation14 + $0x20] sm:$0xf]
    %v847 = vld [vmem:[#allocation14 + $0x24] sm:$0xf]
    %v848 = vld [vmem:[#allocation14 + $0x28] sm:$0xf]
    %v849 = vld [vmem:[#allocation14 + $0x2c] sm:$0xf]
    %v850 = vld [vmem:[#allocation14 + $0x30] sm:$0xf]
    %v851 = vld [vmem:[#allocation14 + $0x34] sm:$0xf]
    %v852 = vld [vmem:[#allocation14 + $0x38] sm:$0xf]
    %v853 = vld [vmem:[#allocation14 + $0x3c] sm:$0xf]
    %v854 = vld [vmem:[%s14] sm:$0x1]
    %v856 = vlaneseq
    %v857 = vshrl.u32 %v856, 7
    %v858 = vsub.s32 0, %v857
    %v859 = vrot.slane %v854, %v858
    %v877 = vunpack.c.l.b16 %v838
    %v878 = vunpack.c.l.b16 %v839
    %v879 = vunpack.c.l.b16 %v840
    %v880 = vunpack.c.l.b16 %v841
    %v881 = vunpack.c.l.b16 %v842
    %v882 = vunpack.c.l.b16 %v843
    %v883 = vunpack.c.l.b16 %v844
    %v884 = vunpack.c.l.b16 %v845
    %v885 = vunpack.c.l.b16 %v846
    %v886 = vunpack.c.l.b16 %v847
    %v887 = vunpack.c.l.b16 %v848
    %v888 = vunpack.c.l.b16 %v849
    %v889 = vunpack.c.l.b16 %v850
    %v890 = vunpack.c.l.b16 %v851
    %v891 = vunpack.c.l.b16 %v852
    %v892 = vunpack.c.l.b16 %v853
    %v893 = vpack.c.b16 %v878, %v877
    %v894 = vpack.c.b16 %v880, %v879
    %v895 = vpack.c.b16 %v882, %v881
    %v896 = vpack.c.b16 %v884, %v883
    %v897 = vpack.c.b16 %v886, %v885
    %v898 = vpack.c.b16 %v888, %v887
    %v899 = vpack.c.b16 %v890, %v889
    %v900 = vpack.c.b16 %v892, %v891
    %909 = vmatprep.subr.bf16.mxu0 0
    %910 = vmatpush1.bf16.msra.mxu0 %v893
    %911 = vmatprep.subr.bf16.mxu0 0
    %912 = vmatpush1.bf16.msra.mxu0 %v894
    %913 = vmatprep.subr.bf16.mxu0 0
    %914 = vmatpush1.bf16.msra.mxu0 %v895
    %915 = vmatprep.subr.bf16.mxu0 0
    %916 = vmatpush1.bf16.msra.mxu0 %v896
    %917 = vmatprep.subr.bf16.mxu0 0
    %918 = vmatpush1.bf16.msra.mxu0 %v897
    %919 = vmatprep.subr.bf16.mxu0 0
    %920 = vmatpush1.bf16.msra.mxu0 %v898
    %921 = vmatprep.subr.bf16.mxu0 0
    %922 = vmatpush1.bf16.msra.mxu0 %v899
    %923 = vmatprep.subr.bf16.mxu0 0
    %924 = vmatpush1.bf16.msra.mxu0 %v900
    %925 = vmatprep.subr.bf16.mxu0 0
    %926 = vmatpush1.bf16.msra.mxu0 0
    %927 = vmatprep.subr.bf16.mxu0 0
    %928 = vmatpush1.bf16.msra.mxu0 0
    %929 = vmatprep.subr.bf16.mxu0 0
    %930 = vmatpush1.bf16.msra.mxu0 0
    %931 = vmatprep.subr.bf16.mxu0 0
    %932 = vmatpush1.bf16.msra.mxu0 0
    %933 = vmatprep.subr.bf16.mxu0 0
    %934 = vmatpush1.bf16.msra.mxu0 0
    %935 = vmatprep.subr.bf16.mxu0 0
    %936 = vmatpush1.bf16.msra.mxu0 0
    %937 = vmatprep.subr.bf16.mxu0 0
    %938 = vmatpush1.bf16.msra.mxu0 0
    %939 = vmatprep.subr.bf16.mxu0 0
    %940 = vmatpush1.bf16.msra.mxu0 0
    %941 = vmatprep.mubr.bf16.mxu0 0
    %942 = vmatmul.mubr.bf16.gmra.mrb[0].mxu0 %v837
    %v943 = vpop.f32.mrb[0].mxu0
    %v944 = vadd.f32 %v859, %v943
    %v945 = vpop.f32.mrb[0].mxu0
    %v946 = vpop.f32.mrb[0].mxu0
    %v947 = vpop.f32.mrb[0].mxu0
    %948 = vdwg.mxu0
    %949 = vst [vmem:[#allocation16] sm:$0xff] %v944
    // Predicated region
    $region94: #{tpu_custom_call.1} parent=1 // pred_check
      _
    $region95: #{tpu_custom_call.1} parent=1 // pred_check_branch
      %951 = sbr.rel (0) target = $region97
    $region96: #{tpu_custom_call.1} parent=1 // pred_region
      %s953 = ssub.s32 128, 128
      %954 = vsyncadd [#allocation4], %s953
      %s956 = sshll.u32 [#allocation16], 4
      %s957 = int_to_ptr.vmem [resolvable:$true] %s956
      %959 = dma.vmem_to_hbm [thread:$0]  %s957, 128, %s15, [#allocation4]
    $region97: #{tpu_custom_call.1} parent=1 // pred_fallthru
      _
    // Predicated region
    $region98: #{tpu_custom_call.1} parent=1 // pred_check
      _
    $region99: #{tpu_custom_call.1} parent=1 // pred_check_branch
      %961 = sbr.rel (0) target = $region101
    $region100: #{tpu_custom_call.1} parent=1 // pred_region
      %962 = dma.done [#allocation4], 128
    $region101: #{tpu_custom_call.1} parent=1 // pred_fallthru
      _
    %963 = vsyncpa [#allocation3], 1
    %964 = vsyncpa [#allocation6], 1
    %965 = vsyncpa [#allocation9], 1
    %966 = vsyncpa [#allocation12], 1
    %967 = vsyncpa [#allocation15], 1
    %968 = vsyncpa [#allocation4], 1

</llo_original>
